<compile_context>
chip_gen: v7x
topology: tpu7x:2x2x1
jax: 0.10.0
libtpu: 0.0.40
codegen_flags: <defaults>
</compile_context>

<pallas_src>
import functools

import jax
import jax.numpy as jnp
from jax.experimental import pallas as pl
from jax.experimental.pallas import tpu as pltpu


def _stripe_kernel(pos_ref, x_ref, o_ref, *, ablation_size, axis_len,
                   divisor, use_mod, mask_on_cols, tr, tc):
    """Zero everything outside the wrapping stripe [pos, pos+k) along one axis.

    pos_ref : SMEM scalar-prefetch ref, shape (1,), int32 (0 <= pos < axis_len)
    x_ref   : VMEM tile (tr, tc) of the flattened (N*C, H*W) view
    o_ref   : VMEM tile (tr, tc)
    """
    pos = pos_ref[0]
    k = ablation_size

    if mask_on_cols:
        # Absolute flat-column index of each lane in this tile (thin strip,
        # broadcast across all rows inside jnp.where).
        local = jax.lax.broadcasted_iota(jnp.int32, (1, tc), 1)
        abs_idx = pl.program_id(1) * tc + local
    else:
        # Absolute flat-row index of each sublane-row in this tile.
        local = jax.lax.broadcasted_iota(jnp.int32, (tr, 1), 0)
        abs_idx = pl.program_id(0) * tr + local

    if use_mod:
        axis_idx = jax.lax.rem(abs_idx, divisor)   # e.g. w = flat_col % W
    else:
        axis_idx = abs_idx // divisor              # e.g. h = flat_col // W

    # keep iff ((axis_idx - pos) mod L) < k, written as two compares + OR
    # (no modulo on the wrap path).
    keep = ((axis_idx >= pos) & (axis_idx < pos + k)) | (axis_idx < pos + k - axis_len)

    x = x_ref[...]
    o_ref[...] = jnp.where(keep, x, jnp.zeros_like(x))


def _round_up(v, m):
    return ((v + m - 1) // m) * m


def _select_tiles(rows, cols, itemsize, budget_bytes=4 * 1024 * 1024):
    """Pick (tr, tc): full-width column tiles preferred, ~budget bytes/buffer,
    and at least 2 grid blocks when the tensor permits (feeds both v7x TCs)."""
    sub_unit = max(8, 32 // max(itemsize, 1))   # sublane packing unit per dtype
    lane_unit = 128

    # Column tile: full row width if one sublane-unit strip fits the budget.
    if cols * sub_unit * itemsize <= budget_bytes:
        tc = cols
    else:
        tc = max(lane_unit,
                 (budget_bytes // (sub_unit * itemsize)) // lane_unit * lane_unit)

    # Row tile: fill the rest of the byte budget (sublane-aligned).
    tc_pad = _round_up(tc, lane_unit)
    tr = max(sub_unit,
             (budget_bytes // (tc_pad * itemsize)) // sub_unit * sub_unit)
    if tr >= rows:
        tr = rows  # full extent is always a legal block dim

    # Guarantee >= 2 blocks so both v7x TensorCores get work (no-op on 1-TC
    # chips). Prefer splitting rows to keep full-width contiguous column DMAs.
    if pl.cdiv(rows, tr) * pl.cdiv(cols, tc) < 2:
        tr_split = _round_up(-(-rows // 2), sub_unit)
        if tr_split < rows:
            tr = tr_split
        else:
            tc_split = _round_up(-(-cols // 2), lane_unit)
            if tc_split < cols:
                tc = tc_split
    return tr, tc


def stripe_ablate(x, pos, ablation_size, dim=3):
    """Pallas implementation of StripeAblator(ablation_size, dim).forward(x, pos).

    x   : (N, C, H, W) array
    pos : python int or int32 scalar; normalized mod x.shape[dim]
    Returns a new array (JAX arrays are immutable; PyTorch mutated in place).
    """
    n, c, h, w = x.shape
    rows, cols = n * c, h * w
    axis_len = x.shape[dim]

    # How to recover the `dim` coordinate from (flat_row, flat_col).
    if dim == 3:
        mask_on_cols, divisor, use_mod = True, w, True    # w = col % W
    elif dim == 2:
        mask_on_cols, divisor, use_mod = True, w, False   # h = col // W
    elif dim == 1:
        mask_on_cols, divisor, use_mod = False, c, True   # c = row % C
    elif dim == 0:
        mask_on_cols, divisor, use_mod = False, c, False  # n = row // C
    else:
        raise ValueError(f"dim must be in 0..3, got {dim}")

    x2 = x.reshape(rows, cols)  # free row-major flatten; lane-dense last dim
    pos_arr = jnp.reshape(jnp.asarray(pos, dtype=jnp.int32) % axis_len, (1,))

    itemsize = jnp.dtype(x.dtype).itemsize
    tr, tc = _select_tiles(rows, cols, itemsize)

    kernel = functools.partial(
        _stripe_kernel,
        ablation_size=int(ablation_size),
        axis_len=int(axis_len),
        divisor=int(divisor),
        use_mod=use_mod,
        mask_on_cols=mask_on_cols,
        tr=tr,
        tc=tc,
    )

    out2 = pl.pallas_call(
        kernel,
        out_shape=jax.ShapeDtypeStruct((rows, cols), x.dtype),
        grid_spec=pltpu.PrefetchScalarGridSpec(
            num_scalar_prefetch=1,
            grid=(pl.cdiv(rows, tr), pl.cdiv(cols, tc)),
            in_specs=[pl.BlockSpec((tr, tc), lambda i, j, pos_ref: (i, j))],
            out_specs=pl.BlockSpec((tr, tc), lambda i, j, pos_ref: (i, j)),
        ),
        compiler_params=pltpu.CompilerParams(
            dimension_semantics=("parallel", "parallel"),
            vmem_limit_bytes=48 * 1024 * 1024,
        ),
    )(pos_arr, x2)

    return out2.reshape(n, c, h, w)


def _reference(x, pos, k, dim=3):
    """Pure-JAX reference mirroring the PyTorch in-place slicing logic."""
    length = x.shape[dim]
    idx = jnp.arange(length)
    if pos + k > length:
        zero = (idx >= pos + k - length) & (idx < pos)
        keep = ~zero
    else:
        keep = (idx >= pos) & (idx < pos + k)
    shape = [1] * x.ndim
    shape[dim] = length
    return jnp.where(keep.reshape(shape), x, jnp.zeros_like(x))


if __name__ == "__main__":
    key = jax.random.PRNGKey(0)
    N, C, H, W = 2, 4, 16, 16
    x = jax.random.normal(key, (N, C, H, W), dtype=jnp.float32)
    k = 4

    # Case 1: non-wrapping stripe along width (pos + k <= W).
    out1 = jax.block_until_ready(stripe_ablate(x, 5, k, dim=3))
    assert out1.shape == x.shape and out1.dtype == x.dtype
    assert jnp.array_equal(out1, _reference(x, 5, k, dim=3)), "dim=3 non-wrap mismatch"

    # Case 2: wrapping stripe along width (pos + k > W).
    out2 = jax.block_until_ready(stripe_ablate(x, 14, k, dim=3))
    assert jnp.array_equal(out2, _reference(x, 14, k, dim=3)), "dim=3 wrap mismatch"

    # Case 3: height axis, wrap case — exercises the dim != 3 index arithmetic.
    out3 = jax.block_until_ready(stripe_ablate(x, 13, k, dim=2))
    assert jnp.array_equal(out3, _reference(x, 13, k, dim=2)), "dim=2 wrap mismatch"

    # Case 4: bf16 input — byte-budget tiling keeps the same DMA size per tile.
    xb = x.astype(jnp.bfloat16)
    out4 = jax.block_until_ready(stripe_ablate(xb, 5, k, dim=3))
    assert out4.dtype == jnp.bfloat16
    assert jnp.array_equal(out4, _reference(xb, 5, k, dim=3)), "bf16 mismatch"

    # Case 5: non-aligned shape (rows=15, cols=408) — exercises the cdiv grid
    # with ragged last blocks; padded-lane writes must be discarded.
    key2 = jax.random.PRNGKey(0)
    y = jax.random.normal(key2, (3, 5, 17, 24), dtype=jnp.float32)
    out5 = jax.block_until_ready(stripe_ablate(y, 22, k, dim=3))   # wrap along W=24
    assert jnp.array_equal(out5, _reference(y, 22, k, dim=3)), "ragged dim=3 mismatch"

    # Case 6: channel axis on the non-aligned shape (row-based mask, wrap).
    out6 = jax.block_until_ready(stripe_ablate(y, 3, k, dim=1))    # wrap along C=5
    assert jnp.array_equal(out6, _reference(y, 3, k, dim=1)), "ragged dim=1 mismatch"

    # Case 7: batch axis (row-based mask, integer-divide path, wrap along N=3).
    out7 = jax.block_until_ready(stripe_ablate(y, 2, k, dim=0))
    assert jnp.array_equal(out7, _reference(y, 2, k, dim=0)), "ragged dim=0 mismatch"

    print("KERNEL_OK")
</pallas_src>

<mosaic_0001>
module attributes {stable_mosaic.version = 11 : i64} {
  func.func @_stripe_kernel(%arg0: i32, %arg1: i32, %arg2: memref<1xi32, #tpu.memory_space<smem>>, %arg3: memref<8x128xf32, #tpu.memory_space<vmem>>, %arg4: memref<8x128xf32, #tpu.memory_space<vmem>>) attributes {dimension_semantics = [#tpu.dimension_semantics<parallel>, #tpu.dimension_semantics<parallel>], iteration_bounds = array<i64: 1, 2>, scalar_prefetch = 1 : i64, scratch_operands = 0 : i64, tpu.core_type = #tpu.core_type<tc>, window_params = [{transform_indices = @transform_0, window_bounds = array<i64: 8, 128>}, {transform_indices = @transform_1, window_bounds = array<i64: 8, 128>}]} {
    %c0 = arith.constant 0 : index
    %0 = memref.load %arg2[%c0] : memref<1xi32, #tpu.memory_space<smem>>
    %1 = tpu.iota {dimensions = array<i32: 1>} : vector<1x128xi32>
    %c128_i32 = arith.constant 128 : i32
    %2 = arith.muli %arg1, %c128_i32 : i32
    %3 = vector.broadcast %2 : i32 to vector<1x128xi32>
    %4 = arith.addi %3, %1 : vector<1x128xi32>
    %c16_i32 = arith.constant 16 : i32
    %5 = vector.broadcast %c16_i32 : i32 to vector<1x128xi32>
    %6 = arith.remsi %4, %5 : vector<1x128xi32>
    %7 = vector.broadcast %0 : i32 to vector<1x128xi32>
    %8 = arith.cmpi sge, %6, %7 : vector<1x128xi32>
    %c4_i32 = arith.constant 4 : i32
    %9 = arith.addi %0, %c4_i32 : i32
    %10 = vector.broadcast %9 : i32 to vector<1x128xi32>
    %11 = arith.cmpi slt, %6, %10 : vector<1x128xi32>
    %12 = arith.andi %8, %11 : vector<1x128xi1>
    %c4_i32_0 = arith.constant 4 : i32
    %13 = arith.addi %0, %c4_i32_0 : i32
    %c16_i32_1 = arith.constant 16 : i32
    %14 = arith.subi %13, %c16_i32_1 : i32
    %15 = vector.broadcast %14 : i32 to vector<1x128xi32>
    %16 = arith.cmpi slt, %6, %15 : vector<1x128xi32>
    %17 = arith.ori %12, %16 : vector<1x128xi1>
    %c0_2 = arith.constant 0 : index
    %c0_3 = arith.constant 0 : index
    %18 = vector.load %arg3[%c0_2, %c0_3] : memref<8x128xf32, #tpu.memory_space<vmem>>, vector<8x128xf32>
    %cst = arith.constant 0.000000e+00 : f32
    %19 = vector.broadcast %cst : f32 to vector<8x128xf32>
    %20 = vector.shape_cast %17 : vector<1x128xi1> to vector<1x128xi1>
    %21 = vector.broadcast %20 : vector<1x128xi1> to vector<8x128xi1>
    %22 = arith.select %21, %18, %19 : vector<8x128xi1>, vector<8x128xf32>
    %c0_4 = arith.constant 0 : index
    %c0_5 = arith.constant 0 : index
    %23 = vector.load %arg4[%c0_4, %c0_5] : memref<8x128xf32, #tpu.memory_space<vmem>>, vector<8x128xf32>
    tpu.vector_store %arg4[%c0_4, %c0_5], %22 {strides = array<i32>} : memref<8x128xf32, #tpu.memory_space<vmem>>, vector<8x128xf32>,
    return
  }
  func.func @transform_0(%arg0: i32, %arg1: i32, %arg2: memref<1xi32, #tpu.memory_space<smem>>) -> (i32, i32) {
    %c0_i32 = arith.constant 0 : i32
    return %arg0, %arg1 : i32, i32
  }
  func.func @transform_1(%arg0: i32, %arg1: i32, %arg2: memref<1xi32, #tpu.memory_space<smem>>) -> (i32, i32) {
    %c0_i32 = arith.constant 0 : i32
    return %arg0, %arg1 : i32, i32
  }
}

</mosaic_0001>

<llo_original>
// kernel: tpu_custom_call.1
$region0: #{tpu_custom_call.1}
  #allocation0 [shape = 'u32[]', space=smem, size = 0x4, offset = 0x4, fixed_abs, tag = 'smem constant byte address 0x4 - core index']
  #allocation1 [shape = 'u32[144,128]{1,0:T(1,128)}', space=vmem, size = 0x12000, scoped, tag = 'internal scratch']
  #allocation2 [shape = 's32[1]{0}', space=sflag, size = 0x4, scoped, tag = 'scoped memory for tpu_custom_call.1']
  #allocation3 [shape = 's32[1]{0:T(128)S(6)}', space=smem, size = 0x200, scoped, tag = 'prefetched SMEM operand 0']
  %s0 = inlined_call_operand.<no memory space> [shape: s32[1], index: 0, kind: input, shape index: {}]
  %s1 = inlined_call_operand.hbm [shape: f32[8,256], index: 1, kind: input, shape index: {}]
  %s2 = inlined_call_operand.hbm [shape: f32[8,256], index: 2, kind: output, shape index: {}]
  %s3 = sld [smem:[#allocation0]]
  $region41: #{tpu_custom_call.1} parent=0
    _
  %s5 = ssub.s32 1, %s3
  %s6 = scalar_select 0, %s5, %s3
  %7 = sst [smem:[#allocation3]] %s0
  $region1: #{tpu_custom_call.1} parent=0
    #allocation4 [shape = 'u8[8192]{0}', space=vmem, size = 0x2000, scoped, tag = 'input window, operand 1']
    #allocation5 [shape = 's32[2]{0}', space=sflag, size = 0x8, scoped, tag = 'scoped memory for tpu_custom_call.1']
    #allocation6 [shape = 's32[2]{0}', space=sflag, size = 0x8, scoped, tag = 'scoped memory for tpu_custom_call.1']
    #allocation7 [shape = 'u8[8192]{0}', space=vmem, size = 0x2000, scoped, tag = 'output window, operand 0']
    %8 = vsyncpa [#allocation5], 0
    %s9 = scalar_lea.sflag [#allocation5], 1
    %10 = vsyncpa %s9, 0
    %11 = vsyncpa [#allocation6], 0
    %s12 = scalar_lea.sflag [#allocation6], 1
    %13 = vsyncpa %s12, 0
    loop: start=0, step=1, limit=4
    $region2: #{tpu_custom_call.1} parent=1 // loop_pre_header
      _
    $region3: #{tpu_custom_call.1} parent=1 // loop_header
      %s15 = sphi 0, %s19
      %p16 = scmp.ge.s32.totalorder %s15, 4
      %s22 = sphi 0, %s34
      %s23 = sphi 0, %s30
      %s24 = sphi 0, %s22
      %s25 = sphi 0, %s23
      %s26 = sphi 0, %s24
      %s27 = sphi 0, %s25
      %s39 = sphi 0, %s41
      %s42 = sphi 0, %s39
      %s43 = sphi 0, %s42
      %s59 = sphi 0, %s43
      %s67 = sphi 0, %s69
      %s70 = sphi 0, %s67
      %s71 = sphi 0, %s70
      %s87 = sphi 0, %s71
    $region4: #{tpu_custom_call.1} parent=1 // loop_header_branch
      %18 = sbr.rel (%p16) target = $region8
    $region5: #{tpu_custom_call.1} parent=1 // loop_body
      %s20 = ssub.s32 %s15, 1
      %s21 = ssub.s32 %s15, 2
      %s28 = sadd.s32 1, %s23
      %p29 = scmp.ge.s32.totalorder %s28, 2
      %s30 = scalar_select %p29, 0, %s28
      %s31 = sadd.s32 1, %s22
      %s32 = scalar_select %p29, %s31, %s22
      %p33 = scmp.ge.s32.totalorder %s32, 1
      %s34 = scalar_select %p33, 0, %s32
      %s35 = ssub.s32 %s22, %s34
      %s36 = ssub.s32 %s23, %s30
      %s37 = sor.u32 %s35, %s36
      %p38 = scmp.eq.s32.totalorder %s37, 0
      %s40 = sadd.s32 %s39, 1
      %s41 = scalar_select %p38, %s39, %s40
      %p44 = pneg %p38
      %p45 = scmp.eq.s32.totalorder %s15, 1
      %p46 = por %p44, %p45
      %p47 = scmp.ne.s32.totalorder %s39, %s42
      %p48 = scmp.eq.s32.totalorder %s15, 0
      %p49 = por %p47, %p48
      %p50 = scmp.ne.s32.totalorder %s39, %s42
      %p51 = scmp.eq.s32.totalorder %s20, 1
      %p52 = por %p50, %p51
      %p53 = scmp.ne.s32.totalorder %s42, %s43
      %p54 = scmp.eq.s32.totalorder %s20, 0
      %p55 = por %p53, %p54
      %p56 = scmp.ne.s32.totalorder %s42, %s43
      %p57 = scmp.eq.s32.totalorder %s21, 1
      %p58 = por %p56, %p57
      %p60 = scmp.ne.s32.totalorder %s43, %s59
      %p61 = scmp.eq.s32.totalorder %s21, 0
      %p62 = por %p60, %p61
      %s63 = ssub.s32 %s22, %s34
      %s64 = ssub.s32 %s23, %s30
      %s65 = sor.u32 %s63, %s64
      %p66 = scmp.eq.s32.totalorder %s65, 0
      %s68 = sadd.s32 %s67, 1
      %s69 = scalar_select %p66, %s67, %s68
      %p72 = pneg %p66
      %p73 = scmp.eq.s32.totalorder %s15, 1
      %p74 = por %p72, %p73
      %p75 = scmp.ne.s32.totalorder %s67, %s70
      %p76 = scmp.eq.s32.totalorder %s15, 0
      %p77 = por %p75, %p76
      %p78 = scmp.ne.s32.totalorder %s67, %s70
      %p79 = scmp.eq.s32.totalorder %s20, 1
      %p80 = por %p78, %p79
      %p81 = scmp.ne.s32.totalorder %s70, %s71
      %p82 = scmp.eq.s32.totalorder %s20, 0
      %p83 = por %p81, %p82
      %p84 = scmp.ne.s32.totalorder %s70, %s71
      %p85 = scmp.eq.s32.totalorder %s21, 1
      %p86 = por %p84, %p85
      %p88 = scmp.ne.s32.totalorder %s71, %s87
      %p89 = scmp.eq.s32.totalorder %s21, 0
      %p90 = por %p88, %p89
      %p91 = scmp.le.s32.totalorder 1, %s15
      %p92 = scmp.lt.s32.totalorder %s15, 3
      %p93 = pnand %p91, %p92
      %p94 = pneg %p93
      // Predicated region
      $region9: #{tpu_custom_call.1} parent=5 // pred_check
        _
      $region10: #{tpu_custom_call.1} parent=5 // pred_check_branch
        %96 = sbr.rel (%p93) target = $region12
      $region11: #{tpu_custom_call.1} parent=5 // pred_region
        %s97 = ssub.s32 %s15, 1
      $region12: #{tpu_custom_call.1} parent=5 // pred_fallthru
        _
      %p98 = scmp.lt.s32.totalorder %s15, 2
      // Predicated region
      $region13: #{tpu_custom_call.1} parent=5 // pred_check
        %p99 = pneg %p98
      $region14: #{tpu_custom_call.1} parent=5 // pred_check_branch
        %101 = sbr.rel (%p99) target = $region16
      $region15: #{tpu_custom_call.1} parent=5 // pred_region
        // Predicated region
        $region17: #{tpu_custom_call.1} parent=15 // pred_check
          %p102 = pneg %p49
        $region18: #{tpu_custom_call.1} parent=15 // pred_check_branch
          %104 = sbr.rel (%p102) target = $region20
        $region19: #{tpu_custom_call.1} parent=15 // pred_region
          %s105 = sand.u32 %s39, 1
          %s106 = scalar_lea.sflag [#allocation5], %s105
          %s107 = sand.u32 %s39, 1
          %s108 = smul.addr %s107, 8
          %s109 = scalar_lea.vmem [#allocation4], %s108
          %s111 = ssub.s32 128, 128
          %112 = vsyncadd %s106, %s111
          %s113 = smul.addr %s22, 2
          %s114 = sadd.s32 %s23, %s113
          %s115 = smul.addr %s114, 128
          %s116 = scalar_lea.hbm %s1, %s115
          %s118 = sshll.u32 %s109, 4
          %s119 = int_to_ptr.vmem [resolvable:$true] %s118
          %121 = dma.hbm_to_vmem [thread:$0]  %s116, 128, %s119, %s106
        $region20: #{tpu_custom_call.1} parent=15 // pred_fallthru
          _
      $region16: #{tpu_custom_call.1} parent=5 // pred_fallthru
        _
      %p122 = scmp.le.s32.totalorder 1, %s15
      %p123 = scmp.lt.s32.totalorder %s15, 3
      %p124 = pnand %p122, %p123
      %p125 = pneg %p124
      // Predicated region
      $region21: #{tpu_custom_call.1} parent=5 // pred_check
        _
      $region22: #{tpu_custom_call.1} parent=5 // pred_check_branch
        %127 = sbr.rel (%p124) target = $region24
      $region23: #{tpu_custom_call.1} parent=5 // pred_region
        %s128 = ssub.s32 %s15, 1
        %s129 = sand.u32 %s42, 1
        %s130 = scalar_lea.sflag [#allocation5], %s129
        %s131 = sand.u32 %s42, 1
        %s132 = smul.addr %s131, 8
        %s133 = scalar_lea.vmem [#allocation4], %s132
        // Predicated region
        $region25: #{tpu_custom_call.1} parent=23 // pred_check
          %p134 = pneg %p55
        $region26: #{tpu_custom_call.1} parent=23 // pred_check_branch
          %136 = sbr.rel (%p134) target = $region28
        $region27: #{tpu_custom_call.1} parent=23 // pred_region
          %137 = dma.done %s130, 128
        $region28: #{tpu_custom_call.1} parent=23 // pred_fallthru
          _
        %s138 = sand.u32 %s42, 1
        %s139 = scalar_lea.sflag [#allocation5], %s138
        %s140 = sand.u32 %s42, 1
        %s141 = smul.addr %s140, 8
        %s142 = scalar_lea.vmem [#allocation4], %s141
        %p143 = pneg %p55
        %p144 = pneg %p52
        %p145 = pneg %p83
        %p146 = pneg %p80
        %s147 = sand.u32 %s70, 1
        %s148 = scalar_lea.sflag [#allocation6], %s147
        %s149 = sand.u32 %s70, 1
        %s150 = smul.addr %s149, 8
        %s151 = scalar_lea.vmem [#allocation7], %s150
        %s152 = sld [smem:[#allocation3]]
        %v153 = vlaneseq
        %v154 = vand.u32 %v153, 127
        %s155 = smul.u32 %s25, 128
        %v156 = vstv %s155
        %v157 = vadd.s32 %v156, %v154
        %vm158 = vcmp.lt.s32.totalorder %v157, 0
        %v159 = vsub.s32 0, %v157
        %v160 = vsel %vm158, %v159, %v157
        %v161 = vshrl.u32 %v160, 4
        %v162 = vand.u32 %v160, 15
        %v163 = vsub.s32 0, %v162
        %v164 = vsel %vm158, %v163, %v162
        %v165 = vstv %s152
        %vm166 = vcmp.ge.s32.totalorder %v164, %v165
        %s167 = sadd.s32 %s152, 4
        %v168 = vstv %s167
        %vm169 = vcmp.lt.s32.totalorder %v164, %v168
        %vm170 = vmand %vm166, %vm169
        %s171 = sadd.s32 %s152, 4294967284
        %v172 = vstv %s171
        %vm173 = vcmp.lt.s32.totalorder %v164, %v172
        %vm174 = vmor %vm170, %vm173
        %v175 = vld [vmem:[%s133] sm:$0xff]
        %v176 = vsel %vm174, 1, 0
        %vm177 = vcmp.eq.s32.totalorder %v176, 1
        %v178 = vsel %vm177, %v175, 0.0
        %179 = vst [vmem:[%s151] sm:$0xff] %v178
        %s180 = sand.u32 %s70, 1
        %s181 = scalar_lea.sflag [#allocation6], %s180
        %s182 = sand.u32 %s70, 1
        %s183 = smul.addr %s182, 8
        %s184 = scalar_lea.vmem [#allocation7], %s183
        // Predicated region
        $region29: #{tpu_custom_call.1} parent=23 // pred_check
          %p185 = pneg %p80
        $region30: #{tpu_custom_call.1} parent=23 // pred_check_branch
          %187 = sbr.rel (%p185) target = $region32
        $region31: #{tpu_custom_call.1} parent=23 // pred_region
          %s189 = ssub.s32 128, 128
          %190 = vsyncadd %s181, %s189
          %s191 = smul.addr %s24, 2
          %s192 = sadd.s32 %s25, %s191
          %s193 = smul.addr %s192, 128
          %s194 = scalar_lea.hbm %s2, %s193
          %s196 = sshll.u32 %s184, 4
          %s197 = int_to_ptr.vmem [resolvable:$true] %s196
          %199 = dma.vmem_to_hbm [thread:$0]  %s197, 128, %s194, %s181
        $region32: #{tpu_custom_call.1} parent=23 // pred_fallthru
          _
      $region24: #{tpu_custom_call.1} parent=5 // pred_fallthru
        _
      %p200 = scmp.le.s32.totalorder 2, %s15
      // Predicated region
      $region33: #{tpu_custom_call.1} parent=5 // pred_check
        %p201 = pneg %p200
      $region34: #{tpu_custom_call.1} parent=5 // pred_check_branch
        %203 = sbr.rel (%p201) target = $region36
      $region35: #{tpu_custom_call.1} parent=5 // pred_region
        %s204 = ssub.s32 %s15, 2
        // Predicated region
        $region37: #{tpu_custom_call.1} parent=35 // pred_check
          %p205 = pneg %p86
        $region38: #{tpu_custom_call.1} parent=35 // pred_check_branch
          %207 = sbr.rel (%p205) target = $region40
        $region39: #{tpu_custom_call.1} parent=35 // pred_region
          %s208 = sand.u32 %s71, 1
          %s209 = scalar_lea.sflag [#allocation6], %s208
          %s210 = sand.u32 %s71, 1
          %s211 = smul.addr %s210, 8
          %s212 = scalar_lea.vmem [#allocation7], %s211
          %213 = dma.done %s209, 128
        $region40: #{tpu_custom_call.1} parent=35 // pred_fallthru
          _
      $region36: #{tpu_custom_call.1} parent=5 // pred_fallthru
        _
    $region6: #{tpu_custom_call.1} parent=1 // loop_footer
      %s19 = sadd.s32 1, %s15
    $region7: #{tpu_custom_call.1} parent=1 // loop_footer_branch
      %14 = sbr.rel target = $region3
    $region8: #{tpu_custom_call.1} parent=1 // loop_exit
      _
    %214 = vsyncpa [#allocation5], 1
    %s215 = scalar_lea.sflag [#allocation5], 1
    %216 = vsyncpa %s215, 1
    %217 = vsyncpa [#allocation6], 1
    %s218 = scalar_lea.sflag [#allocation6], 1
    %219 = vsyncpa %s218, 1

</llo_original>
